<compile_context>
chip_gen: v7x
topology: tpu7x:2x2x1
jax: 0.10.0
libtpu: 0.0.40
codegen_flags: <defaults>
</compile_context>

<pallas_src>
import jax
import jax.numpy as jnp
from jax import lax
from jax.experimental import pallas as pl
from jax.experimental.pallas import tpu as pltpu


# --------------------------------------------------------------------------
# Kernel: one (lane-packed) batch tile -> Linear+LeakyReLU -> Linear -> PReLU
# --------------------------------------------------------------------------
def feature_encoder_kernel(x_ref, w1_ref, b1_ref, w2_ref, b2_ref, alpha_ref,
                           out_ref):
    # Small loop-invariant reads; stay [1, dim] rows and broadcast over
    # sublanes in the add/mul (no [TB, dim] materialization).
    b1 = b1_ref[...]
    b2 = b2_ref[...]
    alpha = alpha_ref[...]

    neg_slope = jnp.float32(0.01)  # nn.LeakyReLU default

    # Layer 1: block-diag-fused (and lane-pack-replicated) branch Linears.
    h1 = jnp.dot(x_ref[...], w1_ref[...],
                 preferred_element_type=jnp.float32,
                 precision=lax.Precision.HIGHEST) + b1
    h1 = jnp.where(h1 >= 0, h1, neg_slope * h1)

    # Layer 2: Linear(input_dim -> hidden_dim) on the (implicitly
    # concatenated) activations, then per-channel PReLU.
    h2 = jnp.dot(h1, w2_ref[...],
                 preferred_element_type=jnp.float32,
                 precision=lax.Precision.HIGHEST) + b2
    out_ref[...] = jnp.where(h2 >= 0, h2, alpha * h2)


# --------------------------------------------------------------------------
# Wrapper: lane packing, batch tiling, resident weights, megacore parallelism
# --------------------------------------------------------------------------
def _round_up(a, m):
    return ((a + m - 1) // m) * m


def feature_encoder(x, fused_params, block_rows=16384):
    """x: [B, prop_num + tweet_num + cat_num + des_num] float32."""
    w1, b1, w2, b2, alpha = fused_params
    B, total = x.shape
    hidden = w2.shape[1]

    # ---- Lane-pack `pack` batch rows into the lane dimension (free reshape).
    pack = 4 if B % 4 == 0 else (2 if B % 2 == 0 else 1)
    Bp = B // pack
    xp = x.reshape(Bp, pack * total)

    if pack > 1:
        eye = jnp.eye(pack, dtype=jnp.float32)
        w1p = jnp.kron(eye, w1)                 # [pack*total, pack*input_dim]
        w2p = jnp.kron(eye, w2)                 # [pack*input_dim, pack*hidden]
        b1p = jnp.tile(b1, (1, pack))
        b2p = jnp.tile(b2, (1, pack))
        alphap = jnp.tile(alpha, (1, pack))
    else:
        w1p, b1p, w2p, b2p, alphap = w1, b1, w2, b2, alpha

    # ---- Packed-row tile: multiple of 8 (sublane rule), >= 2 grid steps when
    # possible so v7x's two TensorCores both get work; Pallas masks the ragged
    # last block, so NO wrapper-side pad / slice (no extra HBM round trip).
    max_tp = max(8, block_rows // pack)
    if Bp <= 8:
        tp = Bp                                  # full-extent block is legal
    else:
        tp = min(max_tp, _round_up(-(-Bp // 2), 8))
        tp = max(8, (tp // 8) * 8)
    grid = (pl.cdiv(Bp, tp),)

    const2 = lambda i: (0, 0)                    # weights stay VMEM-resident

    out = pl.pallas_call(
        feature_encoder_kernel,
        out_shape=jax.ShapeDtypeStruct((Bp, pack * hidden), jnp.float32),
        grid=grid,
        in_specs=[
            # TODO(synk): add pipeline_mode=pl.Buffered(3) here if xprof shows
            # exposed input DMA after the lane-packing change.
            pl.BlockSpec((tp, pack * total), lambda i: (i, 0)),   # x tile
            pl.BlockSpec(w1p.shape, const2),
            pl.BlockSpec(b1p.shape, const2),
            pl.BlockSpec(w2p.shape, const2),
            pl.BlockSpec(b2p.shape, const2),
            pl.BlockSpec(alphap.shape, const2),
        ],
        out_specs=pl.BlockSpec((tp, pack * hidden), lambda i: (i, 0)),
        compiler_params=pltpu.CompilerParams(
            dimension_semantics=("parallel",),
            vmem_limit_bytes=32 * 1024 * 1024,   # explicit: covers double-
        ),                                       # buffered x/out + staging
    )(xp, w1p, b1p, w2p, b2p, alphap)

    return out.reshape(B, hidden)                # free reshape back


# --------------------------------------------------------------------------
# Parameter construction / one-time fusion (plain JAX, outside the kernel)
# --------------------------------------------------------------------------
def init_params(key, prop_num, tweet_num, cat_num, des_num,
                input_dim, hidden_dim):
    """Deterministic synthetic init mirroring nn.Linear / nn.PReLU shapes.

    Weights stored (in_features, out_features): y = x @ W + b.
    """
    q = input_dim // 4

    def linear(k, fan_in, fan_out):
        kw, kb = jax.random.split(k)
        bound = 1.0 / jnp.sqrt(jnp.float32(fan_in))
        w = jax.random.uniform(kw, (fan_in, fan_out), jnp.float32, -bound, bound)
        b = jax.random.uniform(kb, (1, fan_out), jnp.float32, -bound, bound)
        return w, b

    k = jax.random.split(key, 5)
    wd, bd = linear(k[0], des_num, q)
    wt, bt = linear(k[1], tweet_num, q)
    wn, bn = linear(k[2], prop_num, q)
    wc, bc = linear(k[3], cat_num, q)
    wi, bi = linear(k[4], input_dim, hidden_dim)
    alpha = jnp.full((1, hidden_dim), 0.25, jnp.float32)  # nn.PReLU(hidden) default
    return (wd, bd, wt, bt, wn, bn, wc, bc, wi, bi, alpha)


def fuse_params(params, sizes):
    """Build block-diagonal W1 / concatenated b1; pass W2/b2/alpha through.

    x column layout: [num_prop | tweet | cat_prop | des]
    layer-1 output (torch.cat order): [d | t | n | c]
    """
    prop_num, tweet_num, cat_num, des_num = sizes
    (wd, bd, wt, bt, wn, bn, wc, bc, wi, bi, alpha) = params
    q = wd.shape[1]
    total = prop_num + tweet_num + cat_num + des_num

    o_n = 0
    o_t = prop_num
    o_c = prop_num + tweet_num
    o_d = prop_num + tweet_num + cat_num

    w1 = jnp.zeros((total, 4 * q), jnp.float32)
    w1 = w1.at[o_d:o_d + des_num, 0 * q:1 * q].set(wd)
    w1 = w1.at[o_t:o_t + tweet_num, 1 * q:2 * q].set(wt)
    w1 = w1.at[o_n:o_n + prop_num, 2 * q:3 * q].set(wn)
    w1 = w1.at[o_c:o_c + cat_num, 3 * q:4 * q].set(wc)
    b1 = jnp.concatenate([bd, bt, bn, bc], axis=1)
    return (w1, b1, wi, bi, alpha)


# --------------------------------------------------------------------------
# Pure-JAX reference of the torch forward (un-fused), for validation
# --------------------------------------------------------------------------
def reference(x, params, sizes):
    prop_num, tweet_num, cat_num, des_num = sizes
    (wd, bd, wt, bt, wn, bn, wc, bc, wi, bi, alpha) = params
    num_prop = x[:, :prop_num]
    tweet = x[:, prop_num:prop_num + tweet_num]
    cat_prop = x[:, prop_num + tweet_num:prop_num + tweet_num + cat_num]
    des = x[:, prop_num + tweet_num + cat_num:]

    def leaky(h):
        return jnp.where(h >= 0, h, 0.01 * h)

    def mm(a, b):
        return jnp.dot(a, b, precision=lax.Precision.HIGHEST)

    d = leaky(mm(des, wd) + bd)
    t = leaky(mm(tweet, wt) + bt)
    n = leaky(mm(num_prop, wn) + bn)
    c = leaky(mm(cat_prop, wc) + bc)
    h = mm(jnp.concatenate([d, t, n, c], axis=1), wi) + bi
    return jnp.where(h >= 0, h, alpha * h)


if __name__ == "__main__":
    # Small shapes consistent with the module: 4 feature groups, input_dim/4 each.
    prop_num, tweet_num, cat_num, des_num = 5, 8, 3, 8
    input_dim, hidden_dim = 32, 32
    sizes = (prop_num, tweet_num, cat_num, des_num)
    total = prop_num + tweet_num + cat_num + des_num

    key = jax.random.PRNGKey(0)
    kx, kx2, kx3, kp = jax.random.split(key, 4)
    params = init_params(kp, prop_num, tweet_num, cat_num, des_num,
                         input_dim, hidden_dim)
    fused = fuse_params(params, sizes)

    # 1) Single-tile, lane-packed path (pack=4, Bp=8 -> one full-extent tile).
    batch = 32
    x = jax.random.normal(kx, (batch, total), jnp.float32)
    out = jax.jit(lambda xx: feature_encoder(xx, fused))(x)
    out = jax.block_until_ready(out)
    ref = reference(x, params, sizes)
    assert out.shape == (batch, hidden_dim)
    assert jnp.allclose(out, ref, atol=1e-5, rtol=1e-5)

    # 2) Multi-tile path (2 full grid steps, resident weights across steps).
    batch2 = 64
    x2 = jax.random.normal(kx2, (batch2, total), jnp.float32)
    out2 = jax.jit(lambda xx: feature_encoder(xx, fused, block_rows=32))(x2)
    out2 = jax.block_until_ready(out2)
    ref2 = reference(x2, params, sizes)
    assert out2.shape == (batch2, hidden_dim)
    assert jnp.allclose(out2, ref2, atol=1e-5, rtol=1e-5)

    # 3) Ragged-tail path (non-divisible packed batch -> masked last block,
    #    no wrapper-side pad/slice HBM round trip).
    batch3 = 40
    x3 = jax.random.normal(kx3, (batch3, total), jnp.float32)
    out3 = jax.jit(lambda xx: feature_encoder(xx, fused, block_rows=32))(x3)
    out3 = jax.block_until_ready(out3)
    ref3 = reference(x3, params, sizes)
    assert out3.shape == (batch3, hidden_dim)
    assert jnp.allclose(out3, ref3, atol=1e-5, rtol=1e-5)

    print("KERNEL_OK")
</pallas_src>

<mosaic_0001>
module attributes {stable_mosaic.version = 11 : i64} {
  func.func @feature_encoder_kernel(%arg0: i32, %arg1: memref<8x96xf32, #tpu.memory_space<vmem>>, %arg2: memref<96x128xf32, #tpu.memory_space<vmem>>, %arg3: memref<1x128xf32, #tpu.memory_space<vmem>>, %arg4: memref<128x128xf32, #tpu.memory_space<vmem>>, %arg5: memref<1x128xf32, #tpu.memory_space<vmem>>, %arg6: memref<1x128xf32, #tpu.memory_space<vmem>>, %arg7: memref<8x128xf32, #tpu.memory_space<vmem>>) attributes {dimension_semantics = [#tpu.dimension_semantics<parallel>], iteration_bounds = array<i64: 1>, scalar_prefetch = 0 : i64, scratch_operands = 0 : i64, tpu.core_type = #tpu.core_type<tc>, window_params = [{transform_indices = @transform_0, window_bounds = array<i64: 8, 96>}, {pipeline_mode = #tpu.pipeline_mode<synchronous>, transform_indices = @transform_1, window_bounds = array<i64: 96, 128>}, {pipeline_mode = #tpu.pipeline_mode<synchronous>, transform_indices = @transform_2, window_bounds = array<i64: 1, 128>}, {pipeline_mode = #tpu.pipeline_mode<synchronous>, transform_indices = @transform_3, window_bounds = array<i64: 128, 128>}, {pipeline_mode = #tpu.pipeline_mode<synchronous>, transform_indices = @transform_4, window_bounds = array<i64: 1, 128>}, {pipeline_mode = #tpu.pipeline_mode<synchronous>, transform_indices = @transform_5, window_bounds = array<i64: 1, 128>}, {transform_indices = @transform_6, window_bounds = array<i64: 8, 128>}]} {
    %c0 = arith.constant 0 : index
    %c0_0 = arith.constant 0 : index
    %0 = vector.load %arg3[%c0, %c0_0] : memref<1x128xf32, #tpu.memory_space<vmem>>, vector<1x128xf32>
    %c0_1 = arith.constant 0 : index
    %c0_2 = arith.constant 0 : index
    %1 = vector.load %arg5[%c0_1, %c0_2] : memref<1x128xf32, #tpu.memory_space<vmem>>, vector<1x128xf32>
    %c0_3 = arith.constant 0 : index
    %c0_4 = arith.constant 0 : index
    %2 = vector.load %arg6[%c0_3, %c0_4] : memref<1x128xf32, #tpu.memory_space<vmem>>, vector<1x128xf32>
    %c0_5 = arith.constant 0 : index
    %c0_6 = arith.constant 0 : index
    %3 = vector.load %arg1[%c0_5, %c0_6] : memref<8x96xf32, #tpu.memory_space<vmem>>, vector<8x96xf32>
    %c0_7 = arith.constant 0 : index
    %c0_8 = arith.constant 0 : index
    %4 = vector.load %arg2[%c0_7, %c0_8] : memref<96x128xf32, #tpu.memory_space<vmem>>, vector<96x128xf32>
    %cst = arith.constant dense<0.000000e+00> : vector<8x128xf32>
    %5 = tpu.matmul %3, %4, %cst {dimension_numbers = #tpu.dot_dimension_numbers<[1], [0], [0], [1], [0, 0, 1, 1], [], []>, precision = #tpu.contract_precision<fp32>} : vector<8x96xf32>, vector<96x128xf32>, vector<8x128xf32> -> vector<8x128xf32>
    %6 = vector.broadcast %0 : vector<1x128xf32> to vector<8x128xf32>
    %7 = arith.addf %5, %6 : vector<8x128xf32>
    %cst_9 = arith.constant 0.000000e+00 : f32
    %8 = vector.broadcast %cst_9 : f32 to vector<8x128xf32>
    %9 = arith.cmpf oge, %7, %8 : vector<8x128xf32>
    %cst_10 = arith.constant 0.00999999977 : f32
    %10 = vector.broadcast %cst_10 : f32 to vector<8x128xf32>
    %11 = arith.mulf %10, %7 : vector<8x128xf32>
    %12 = arith.select %9, %7, %11 : vector<8x128xi1>, vector<8x128xf32>
    %c0_11 = arith.constant 0 : index
    %c0_12 = arith.constant 0 : index
    %13 = vector.load %arg4[%c0_11, %c0_12] : memref<128x128xf32, #tpu.memory_space<vmem>>, vector<128x128xf32>
    %cst_13 = arith.constant dense<0.000000e+00> : vector<8x128xf32>
    %14 = tpu.matmul %12, %13, %cst_13 {dimension_numbers = #tpu.dot_dimension_numbers<[1], [0], [0], [1], [0, 0, 1, 1], [], []>, precision = #tpu.contract_precision<fp32>} : vector<8x128xf32>, vector<128x128xf32>, vector<8x128xf32> -> vector<8x128xf32>
    %15 = vector.broadcast %1 : vector<1x128xf32> to vector<8x128xf32>
    %16 = arith.addf %14, %15 : vector<8x128xf32>
    %cst_14 = arith.constant 0.000000e+00 : f32
    %17 = vector.broadcast %cst_14 : f32 to vector<8x128xf32>
    %18 = arith.cmpf oge, %16, %17 : vector<8x128xf32>
    %19 = vector.broadcast %2 : vector<1x128xf32> to vector<8x128xf32>
    %20 = arith.mulf %19, %16 : vector<8x128xf32>
    %21 = arith.select %18, %16, %20 : vector<8x128xi1>, vector<8x128xf32>
    %c0_15 = arith.constant 0 : index
    %c0_16 = arith.constant 0 : index
    %22 = vector.load %arg7[%c0_15, %c0_16] : memref<8x128xf32, #tpu.memory_space<vmem>>, vector<8x128xf32>
    tpu.vector_store %arg7[%c0_15, %c0_16], %21 {strides = array<i32>} : memref<8x128xf32, #tpu.memory_space<vmem>>, vector<8x128xf32>,
    return
  }
  func.func @transform_0(%arg0: i32) -> (i32, i32) {
    %c0_i32 = arith.constant 0 : i32
    %c0_i32_0 = arith.constant 0 : i32
    return %arg0, %c0_i32 : i32, i32
  }
  func.func @transform_1(%arg0: i32) -> (i32, i32) {
    %c0_i32 = arith.constant 0 : i32
    %c0_i32_0 = arith.constant 0 : i32
    %c0_i32_1 = arith.constant 0 : i32
    return %c0_i32, %c0_i32_0 : i32, i32
  }
  func.func @transform_2(%arg0: i32) -> (i32, i32) {
    %c0_i32 = arith.constant 0 : i32
    %c0_i32_0 = arith.constant 0 : i32
    %c0_i32_1 = arith.constant 0 : i32
    return %c0_i32, %c0_i32_0 : i32, i32
  }
  func.func @transform_3(%arg0: i32) -> (i32, i32) {
    %c0_i32 = arith.constant 0 : i32
    %c0_i32_0 = arith.constant 0 : i32
    %c0_i32_1 = arith.constant 0 : i32
    return %c0_i32, %c0_i32_0 : i32, i32
  }
  func.func @transform_4(%arg0: i32) -> (i32, i32) {
    %c0_i32 = arith.constant 0 : i32
    %c0_i32_0 = arith.constant 0 : i32
    %c0_i32_1 = arith.constant 0 : i32
    return %c0_i32, %c0_i32_0 : i32, i32
  }
  func.func @transform_5(%arg0: i32) -> (i32, i32) {
    %c0_i32 = arith.constant 0 : i32
    %c0_i32_0 = arith.constant 0 : i32
    %c0_i32_1 = arith.constant 0 : i32
    return %c0_i32, %c0_i32_0 : i32, i32
  }
  func.func @transform_6(%arg0: i32) -> (i32, i32) {
    %c0_i32 = arith.constant 0 : i32
    %c0_i32_0 = arith.constant 0 : i32
    return %arg0, %c0_i32 : i32, i32
  }
}

</mosaic_0001>

<llo_original>
// kernel: tile.9
$region0: #{tile.9}
  #allocation0 [shape = 's32[1]{0}', space=sflag, size = 0x4, scoped, tag = 'scoped memory for tile.9']
  %s0 = inlined_call_operand.<no memory space> [shape: f32[], index: 0, kind: input, shape index: {}]
  %s1 = inlined_call_operand.vmem [shape: f32[1,128], index: 1, kind: output, shape index: {}]
  %v2 = vstv %s0
  %3 = vst [vmem:[%s1] sm:$0x1] %v2

// kernel: _lambda_.1
$region0: #{_lambda_.1}
  #allocation0 [shape = 'u32[]', space=smem, size = 0x4, offset = 0x4, fixed_abs, tag = 'smem constant byte address 0x4 - core index']
  #allocation1 [shape = 'u32[144,128]{1,0:T(1,128)}', space=vmem, size = 0x12000, scoped, tag = 'internal scratch']
  %s0 = inlined_call_operand.vmem [shape: f32[8,96], index: 0, kind: input, shape index: {}]
  %s1 = inlined_call_operand.vmem [shape: f32[96,128], index: 1, kind: input, shape index: {}]
  %s2 = inlined_call_operand.vmem [shape: f32[1,128], index: 2, kind: input, shape index: {}]
  %s3 = inlined_call_operand.vmem [shape: f32[128,128], index: 3, kind: input, shape index: {}]
  %s4 = inlined_call_operand.vmem [shape: f32[1,128], index: 4, kind: input, shape index: {}]
  %s5 = inlined_call_operand.vmem [shape: f32[1,128], index: 5, kind: input, shape index: {}]
  %s6 = inlined_call_operand.vmem [shape: f32[8,128], index: 6, kind: output, shape index: {}]
  %s7 = sld [smem:[#allocation0]]
  $region34: #{_lambda_.1} parent=0
    _
  %s9 = ssub.s32 1, %s7
  %s10 = scalar_select 0, %s9, %s7
  // Predicated region
  $region2: #{_lambda_.1} parent=0 // pred_check
    _
  $region3: #{_lambda_.1} parent=0 // pred_check_branch
    %12 = sbr.rel (0) target = $region5
  $region4: #{_lambda_.1} parent=0 // pred_region
    _
  $region5: #{_lambda_.1} parent=0 // pred_fallthru
    _
  // Predicated region
  $region6: #{_lambda_.1} parent=0 // pred_check
    _
  $region7: #{_lambda_.1} parent=0 // pred_check_branch
    %14 = sbr.rel (0) target = $region9
  $region8: #{_lambda_.1} parent=0 // pred_region
    _
  $region9: #{_lambda_.1} parent=0 // pred_fallthru
    _
  // Predicated region
  $region10: #{_lambda_.1} parent=0 // pred_check
    _
  $region11: #{_lambda_.1} parent=0 // pred_check_branch
    %16 = sbr.rel (0) target = $region13
  $region12: #{_lambda_.1} parent=0 // pred_region
    _
  $region13: #{_lambda_.1} parent=0 // pred_fallthru
    _
  // Predicated region
  $region14: #{_lambda_.1} parent=0 // pred_check
    _
  $region15: #{_lambda_.1} parent=0 // pred_check_branch
    %18 = sbr.rel (0) target = $region17
  $region16: #{_lambda_.1} parent=0 // pred_region
    _
  $region17: #{_lambda_.1} parent=0 // pred_fallthru
    _
  // Predicated region
  $region18: #{_lambda_.1} parent=0 // pred_check
    _
  $region19: #{_lambda_.1} parent=0 // pred_check_branch
    %20 = sbr.rel (0) target = $region21
  $region20: #{_lambda_.1} parent=0 // pred_region
    _
  $region21: #{_lambda_.1} parent=0 // pred_fallthru
    _
  // Predicated region
  $region22: #{_lambda_.1} parent=0 // pred_check
    _
  $region23: #{_lambda_.1} parent=0 // pred_check_branch
    %22 = sbr.rel (0) target = $region25
  $region24: #{_lambda_.1} parent=0 // pred_region
    _
  $region25: #{_lambda_.1} parent=0 // pred_fallthru
    _
  %v23 = vld [vmem:[%s2] sm:$0x1]
  %v24 = vld [vmem:[%s4] sm:$0x1]
  %v25 = vld [vmem:[%s5] sm:$0x1]
  %v26 = vld [vmem:[%s0] sm:$0xff]
  %v27 = vld [vmem:[%s1] sm:$0xff]
  %v28 = vld [vmem:[%s1 + $0x8] sm:$0xff]
  %v29 = vld [vmem:[%s1 + $0x10] sm:$0xff]
  %v30 = vld [vmem:[%s1 + $0x18] sm:$0xff]
  %v31 = vld [vmem:[%s1 + $0x20] sm:$0xff]
  %v32 = vld [vmem:[%s1 + $0x28] sm:$0xff]
  %v33 = vld [vmem:[%s1 + $0x30] sm:$0xff]
  %v34 = vld [vmem:[%s1 + $0x38] sm:$0xff]
  %v35 = vld [vmem:[%s1 + $0x40] sm:$0xff]
  %v36 = vld [vmem:[%s1 + $0x48] sm:$0xff]
  %v37 = vld [vmem:[%s1 + $0x50] sm:$0xff]
  %v38 = vld [vmem:[%s1 + $0x58] sm:$0xff]
  %v40 = vlaneseq
  %v41 = vshrl.u32 %v40, 7
  %v42 = vsub.s32 0, %v41
  %v43 = vrot.slane %v23, %v42
  %vm45 = vcmask 785408
  %v47 = vsel %vm45, %v26, 0
  %49 = vmatprep.subr.mxu0 0.0
  %v50 = vand.u32 %v27, 4294901760
  %51 = vmatpush1.msra.mxu0 %v50
  %52 = vmatprep.subr.mxu0 0.0
  %v53 = vand.u32 %v28, 4294901760
  %54 = vmatpush1.msra.mxu0 %v53
  %55 = vmatprep.subr.mxu0 0.0
  %v56 = vand.u32 %v29, 4294901760
  %57 = vmatpush1.msra.mxu0 %v56
  %58 = vmatprep.subr.mxu0 0.0
  %v59 = vand.u32 %v30, 4294901760
  %60 = vmatpush1.msra.mxu0 %v59
  %61 = vmatprep.subr.mxu0 0.0
  %v62 = vand.u32 %v31, 4294901760
  %63 = vmatpush1.msra.mxu0 %v62
  %64 = vmatprep.subr.mxu0 0.0
  %v65 = vand.u32 %v32, 4294901760
  %66 = vmatpush1.msra.mxu0 %v65
  %67 = vmatprep.subr.mxu0 0.0
  %v68 = vand.u32 %v33, 4294901760
  %69 = vmatpush1.msra.mxu0 %v68
  %70 = vmatprep.subr.mxu0 0.0
  %v71 = vand.u32 %v34, 4294901760
  %72 = vmatpush1.msra.mxu0 %v71
  %73 = vmatprep.subr.mxu0 0.0
  %v74 = vand.u32 %v35, 4294901760
  %75 = vmatpush1.msra.mxu0 %v74
  %76 = vmatprep.subr.mxu0 0.0
  %v77 = vand.u32 %v36, 4294901760
  %78 = vmatpush1.msra.mxu0 %v77
  %79 = vmatprep.subr.mxu0 0.0
  %v80 = vand.u32 %v37, 4294901760
  %81 = vmatpush1.msra.mxu0 %v80
  %82 = vmatprep.subr.mxu0 0.0
  %v83 = vand.u32 %v38, 4294901760
  %84 = vmatpush1.msra.mxu0 %v83
  %85 = vmatprep.subr.mxu0 0.0
  %86 = vmatpush1.msra.mxu0 0.0
  %87 = vmatprep.subr.mxu0 0.0
  %88 = vmatpush1.msra.mxu0 0.0
  %89 = vmatprep.subr.mxu0 0.0
  %90 = vmatpush1.msra.mxu0 0.0
  %91 = vmatprep.subr.mxu0 0.0
  %92 = vmatpush1.msra.mxu0 0.0
  %93 = vmatprep.subr.mxu0 0.0
  %94 = vmatpush1.msra.mxu0 0.0
  %95 = vmatprep.subr.mxu0 0.0
  %96 = vmatpush1.msra.mxu0 0.0
  %97 = vmatprep.subr.mxu0 0.0
  %98 = vmatpush1.msra.mxu0 0.0
  %99 = vmatprep.subr.mxu0 0.0
  %100 = vmatpush1.msra.mxu0 0.0
  %101 = vmatprep.subr.mxu0 0.0
  %102 = vmatpush1.msra.mxu0 0.0
  %103 = vmatprep.subr.mxu0 0.0
  %104 = vmatpush1.msra.mxu0 0.0
  %105 = vmatprep.subr.mxu0 0.0
  %106 = vmatpush1.msra.mxu0 0.0
  %107 = vmatprep.subr.mxu0 0.0
  %108 = vmatpush1.msra.mxu0 0.0
  %109 = vmatprep.subr.mxu0 0.0
  %110 = vmatpush1.msra.mxu0 0.0
  %111 = vmatprep.subr.mxu0 0.0
  %112 = vmatpush1.msra.mxu0 0.0
  %113 = vmatprep.subr.mxu0 0.0
  %114 = vmatpush1.msra.mxu0 0.0
  %115 = vmatprep.subr.mxu0 0.0
  %116 = vmatpush1.msra.mxu0 0.0
  %117 = vmatprep.subr.mxu0 0.0
  %118 = vmatpush1.msra.mxu0 0.0
  %119 = vmatprep.subr.mxu0 0.0
  %120 = vmatpush1.msra.mxu0 0.0
  %121 = vmatprep.subr.mxu0 0.0
  %122 = vmatpush1.msra.mxu0 0.0
  %123 = vmatprep.subr.mxu0 0.0
  %124 = vmatpush1.msra.mxu0 0.0
  %125 = vmatprep.mubr.f32.mxu0 0.0
  %v126 = vand.u32 %v47, 4294901760
  %v127 = vsub.f32 %v47, %v126
  %v128 = vand.u32 %v127, 4294901760
  %v129 = vsub.f32 %v127, %v128
  %v130 = vand.u32 %v129, 4294901760
  %131 = vmatmul.mubr.f32.gmra.mrb[0].mxu0 %v130
  %v132 = vpop.f32.mrb[0].mxu0
  %v133 = vadd.f32 %v43, %v132
  %v134 = vpop.f32.mrb[0].mxu0
  %135 = vdwg.mxu0
  %136 = vmatprep.subr.mxu0 0.0
  %v137 = vand.u32 %v27, 4294901760
  %v138 = vsub.f32 %v27, %v137
  %v139 = vand.u32 %v138, 4294901760
  %v140 = vsub.f32 %v138, %v139
  %v141 = vand.u32 %v140, 4294901760
  %142 = vmatpush1.msra.mxu0 %v141
  %143 = vmatprep.subr.mxu0 0.0
  %v144 = vand.u32 %v28, 4294901760
  %v145 = vsub.f32 %v28, %v144
  %v146 = vand.u32 %v145, 4294901760
  %v147 = vsub.f32 %v145, %v146
  %v148 = vand.u32 %v147, 4294901760
  %149 = vmatpush1.msra.mxu0 %v148
  %150 = vmatprep.subr.mxu0 0.0
  %v151 = vand.u32 %v29, 4294901760
  %v152 = vsub.f32 %v29, %v151
  %v153 = vand.u32 %v152, 4294901760
  %v154 = vsub.f32 %v152, %v153
  %v155 = vand.u32 %v154, 4294901760
  %156 = vmatpush1.msra.mxu0 %v155
  %157 = vmatprep.subr.mxu0 0.0
  %v158 = vand.u32 %v30, 4294901760
  %v159 = vsub.f32 %v30, %v158
  %v160 = vand.u32 %v159, 4294901760
  %v161 = vsub.f32 %v159, %v160
  %v162 = vand.u32 %v161, 4294901760
  %163 = vmatpush1.msra.mxu0 %v162
  %164 = vmatprep.subr.mxu0 0.0
  %v165 = vand.u32 %v31, 4294901760
  %v166 = vsub.f32 %v31, %v165
  %v167 = vand.u32 %v166, 4294901760
  %v168 = vsub.f32 %v166, %v167
  %v169 = vand.u32 %v168, 4294901760
  %170 = vmatpush1.msra.mxu0 %v169
  %171 = vmatprep.subr.mxu0 0.0
  %v172 = vand.u32 %v32, 4294901760
  %v173 = vsub.f32 %v32, %v172
  %v174 = vand.u32 %v173, 4294901760
  %v175 = vsub.f32 %v173, %v174
  %v176 = vand.u32 %v175, 4294901760
  %177 = vmatpush1.msra.mxu0 %v176
  %178 = vmatprep.subr.mxu0 0.0
  %v179 = vand.u32 %v33, 4294901760
  %v180 = vsub.f32 %v33, %v179
  %v181 = vand.u32 %v180, 4294901760
  %v182 = vsub.f32 %v180, %v181
  %v183 = vand.u32 %v182, 4294901760
  %184 = vmatpush1.msra.mxu0 %v183
  %185 = vmatprep.subr.mxu0 0.0
  %v186 = vand.u32 %v34, 4294901760
  %v187 = vsub.f32 %v34, %v186
  %v188 = vand.u32 %v187, 4294901760
  %v189 = vsub.f32 %v187, %v188
  %v190 = vand.u32 %v189, 4294901760
  %191 = vmatpush1.msra.mxu0 %v190
  %192 = vmatprep.subr.mxu0 0.0
  %v193 = vand.u32 %v35, 4294901760
  %v194 = vsub.f32 %v35, %v193
  %v195 = vand.u32 %v194, 4294901760
  %v196 = vsub.f32 %v194, %v195
  %v197 = vand.u32 %v196, 4294901760
  %198 = vmatpush1.msra.mxu0 %v197
  %199 = vmatprep.subr.mxu0 0.0
  %v200 = vand.u32 %v36, 4294901760
  %v201 = vsub.f32 %v36, %v200
  %v202 = vand.u32 %v201, 4294901760
  %v203 = vsub.f32 %v201, %v202
  %v204 = vand.u32 %v203, 4294901760
  %205 = vmatpush1.msra.mxu0 %v204
  %206 = vmatprep.subr.mxu0 0.0
  %v207 = vand.u32 %v37, 4294901760
  %v208 = vsub.f32 %v37, %v207
  %v209 = vand.u32 %v208, 4294901760
  %v210 = vsub.f32 %v208, %v209
  %v211 = vand.u32 %v210, 4294901760
  %212 = vmatpush1.msra.mxu0 %v211
  %213 = vmatprep.subr.mxu0 0.0
  %v214 = vand.u32 %v38, 4294901760
  %v215 = vsub.f32 %v38, %v214
  %v216 = vand.u32 %v215, 4294901760
  %v217 = vsub.f32 %v215, %v216
  %v218 = vand.u32 %v217, 4294901760
  %219 = vmatpush1.msra.mxu0 %v218
  %220 = vmatprep.subr.mxu0 0.0
  %221 = vmatpush1.msra.mxu0 0.0
  %222 = vmatprep.subr.mxu0 0.0
  %223 = vmatpush1.msra.mxu0 0.0
  %224 = vmatprep.subr.mxu0 0.0
  %225 = vmatpush1.msra.mxu0 0.0
  %226 = vmatprep.subr.mxu0 0.0
  %227 = vmatpush1.msra.mxu0 0.0
  %228 = vmatprep.subr.mxu0 0.0
  %229 = vmatpush1.msra.mxu0 0.0
  %230 = vmatprep.subr.mxu0 0.0
  %231 = vmatpush1.msra.mxu0 0.0
  %232 = vmatprep.subr.mxu0 0.0
  %233 = vmatpush1.msra.mxu0 0.0
  %234 = vmatprep.subr.mxu0 0.0
  %235 = vmatpush1.msra.mxu0 0.0
  %236 = vmatprep.subr.mxu0 0.0
  %237 = vmatpush1.msra.mxu0 0.0
  %238 = vmatprep.subr.mxu0 0.0
  %239 = vmatpush1.msra.mxu0 0.0
  %240 = vmatprep.subr.mxu0 0.0
  %241 = vmatpush1.msra.mxu0 0.0
  %242 = vmatprep.subr.mxu0 0.0
  %243 = vmatpush1.msra.mxu0 0.0
  %244 = vmatprep.subr.mxu0 0.0
  %245 = vmatpush1.msra.mxu0 0.0
  %246 = vmatprep.subr.mxu0 0.0
  %247 = vmatpush1.msra.mxu0 0.0
  %248 = vmatprep.subr.mxu0 0.0
  %249 = vmatpush1.msra.mxu0 0.0
  %250 = vmatprep.subr.mxu0 0.0
  %251 = vmatpush1.msra.mxu0 0.0
  %252 = vmatprep.subr.mxu0 0.0
  %253 = vmatpush1.msra.mxu0 0.0
  %254 = vmatprep.subr.mxu0 0.0
  %255 = vmatpush1.msra.mxu0 0.0
  %256 = vmatprep.subr.mxu0 0.0
  %257 = vmatpush1.msra.mxu0 0.0
  %258 = vmatprep.subr.mxu0 0.0
  %259 = vmatpush1.msra.mxu0 0.0
  %260 = vmatprep.mubr.f32.mxu0 0.0
  %v261 = vand.u32 %v47, 4294901760
  %262 = vmatmul.mubr.f32.gmra.mrb[0].mxu0 %v261
  %v263 = vpop.f32.mrb[0].mxu0
  %v264 = vadd.f32 %v133, %v263
  %v265 = vpop.f32.mrb[0].mxu0
  %266 = vdwg.mxu0
  %267 = vmatprep.subr.mxu0 0.0
  %v268 = vand.u32 %v27, 4294901760
  %v269 = vsub.f32 %v27, %v268
  %270 = vmatpush1.msra.mxu0 %v269
  %271 = vmatprep.subr.mxu0 0.0
  %v272 = vand.u32 %v28, 4294901760
  %v273 = vsub.f32 %v28, %v272
  %274 = vmatpush1.msra.mxu0 %v273
  %275 = vmatprep.subr.mxu0 0.0
  %v276 = vand.u32 %v29, 4294901760
  %v277 = vsub.f32 %v29, %v276
  %278 = vmatpush1.msra.mxu0 %v277
  %279 = vmatprep.subr.mxu0 0.0
  %v280 = vand.u32 %v30, 4294901760
  %v281 = vsub.f32 %v30, %v280
  %282 = vmatpush1.msra.mxu0 %v281
  %283 = vmatprep.subr.mxu0 0.0
  %v284 = vand.u32 %v31, 4294901760
  %v285 = vsub.f32 %v31, %v284
  %286 = vmatpush1.msra.mxu0 %v285
  %287 = vmatprep.subr.mxu0 0.0
  %v288 = vand.u32 %v32, 4294901760
  %v289 = vsub.f32 %v32, %v288
  %290 = vmatpush1.msra.mxu0 %v289
  %291 = vmatprep.subr.mxu0 0.0
  %v292 = vand.u32 %v33, 4294901760
  %v293 = vsub.f32 %v33, %v292
  %294 = vmatpush1.msra.mxu0 %v293
  %295 = vmatprep.subr.mxu0 0.0
  %v296 = vand.u32 %v34, 4294901760
  %v297 = vsub.f32 %v34, %v296
  %298 = vmatpush1.msra.mxu0 %v297
  %299 = vmatprep.subr.mxu0 0.0
  %v300 = vand.u32 %v35, 4294901760
  %v301 = vsub.f32 %v35, %v300
  %302 = vmatpush1.msra.mxu0 %v301
  %303 = vmatprep.subr.mxu0 0.0
  %v304 = vand.u32 %v36, 4294901760
  %v305 = vsub.f32 %v36, %v304
  %306 = vmatpush1.msra.mxu0 %v305
  %307 = vmatprep.subr.mxu0 0.0
  %v308 = vand.u32 %v37, 4294901760
  %v309 = vsub.f32 %v37, %v308
  %310 = vmatpush1.msra.mxu0 %v309
  %311 = vmatprep.subr.mxu0 0.0
  %v312 = vand.u32 %v38, 4294901760
  %v313 = vsub.f32 %v38, %v312
  %314 = vmatpush1.msra.mxu0 %v313
  %315 = vmatprep.subr.mxu0 0.0
  %316 = vmatpush1.msra.mxu0 0.0
  %317 = vmatprep.subr.mxu0 0.0
  %318 = vmatpush1.msra.mxu0 0.0
  %319 = vmatprep.subr.mxu0 0.0
  %320 = vmatpush1.msra.mxu0 0.0
  %321 = vmatprep.subr.mxu0 0.0
  %322 = vmatpush1.msra.mxu0 0.0
  %323 = vmatprep.subr.mxu0 0.0
  %324 = vmatpush1.msra.mxu0 0.0
  %325 = vmatprep.subr.mxu0 0.0
  %326 = vmatpush1.msra.mxu0 0.0
  %327 = vmatprep.subr.mxu0 0.0
  %328 = vmatpush1.msra.mxu0 0.0
  %329 = vmatprep.subr.mxu0 0.0
  %330 = vmatpush1.msra.mxu0 0.0
  %331 = vmatprep.subr.mxu0 0.0
  %332 = vmatpush1.msra.mxu0 0.0
  %333 = vmatprep.subr.mxu0 0.0
  %334 = vmatpush1.msra.mxu0 0.0
  %335 = vmatprep.subr.mxu0 0.0
  %336 = vmatpush1.msra.mxu0 0.0
  %337 = vmatprep.subr.mxu0 0.0
  %338 = vmatpush1.msra.mxu0 0.0
  %339 = vmatprep.subr.mxu0 0.0
  %340 = vmatpush1.msra.mxu0 0.0
  %341 = vmatprep.subr.mxu0 0.0
  %342 = vmatpush1.msra.mxu0 0.0
  %343 = vmatprep.subr.mxu0 0.0
  %344 = vmatpush1.msra.mxu0 0.0
  %345 = vmatprep.subr.mxu0 0.0
  %346 = vmatpush1.msra.mxu0 0.0
  %347 = vmatprep.subr.mxu0 0.0
  %348 = vmatpush1.msra.mxu0 0.0
  %349 = vmatprep.subr.mxu0 0.0
  %350 = vmatpush1.msra.mxu0 0.0
  %351 = vmatprep.subr.mxu0 0.0
  %352 = vmatpush1.msra.mxu0 0.0
  %353 = vmatprep.subr.mxu0 0.0
  %354 = vmatpush1.msra.mxu0 0.0
  %355 = vmatprep.mubr.f32.mxu0 0.0
  %v356 = vand.u32 %v47, 4294901760
  %v357 = vsub.f32 %v47, %v356
  %358 = vmatmul.mubr.f32.gmra.mrb[0].mxu0 %v357
  %v359 = vpop.f32.mrb[0].mxu0
  %v360 = vadd.f32 %v264, %v359
  %v361 = vpop.f32.mrb[0].mxu0
  %362 = vdwg.mxu0
  %363 = vmatprep.subr.mxu0 0.0
  %v364 = vand.u32 %v27, 4294901760
  %365 = vmatpush1.msra.mxu0 %v364
  %366 = vmatprep.subr.mxu0 0.0
  %v367 = vand.u32 %v28, 4294901760
  %368 = vmatpush1.msra.mxu0 %v367
  %369 = vmatprep.subr.mxu0 0.0
  %v370 = vand.u32 %v29, 4294901760
  %371 = vmatpush1.msra.mxu0 %v370
  %372 = vmatprep.subr.mxu0 0.0
  %v373 = vand.u32 %v30, 4294901760
  %374 = vmatpush1.msra.mxu0 %v373
  %375 = vmatprep.subr.mxu0 0.0
  %v376 = vand.u32 %v31, 4294901760
  %377 = vmatpush1.msra.mxu0 %v376
  %378 = vmatprep.subr.mxu0 0.0
  %v379 = vand.u32 %v32, 4294901760
  %380 = vmatpush1.msra.mxu0 %v379
  %381 = vmatprep.subr.mxu0 0.0
  %v382 = vand.u32 %v33, 4294901760
  %383 = vmatpush1.msra.mxu0 %v382
  %384 = vmatprep.subr.mxu0 0.0
  %v385 = vand.u32 %v34, 4294901760
  %386 = vmatpush1.msra.mxu0 %v385
  %387 = vmatprep.subr.mxu0 0.0
  %v388 = vand.u32 %v35, 4294901760
  %389 = vmatpush1.msra.mxu0 %v388
  %390 = vmatprep.subr.mxu0 0.0
  %v391 = vand.u32 %v36, 4294901760
  %392 = vmatpush1.msra.mxu0 %v391
  %393 = vmatprep.subr.mxu0 0.0
  %v394 = vand.u32 %v37, 4294901760
  %395 = vmatpush1.msra.mxu0 %v394
  %396 = vmatprep.subr.mxu0 0.0
  %v397 = vand.u32 %v38, 4294901760
  %398 = vmatpush1.msra.mxu0 %v397
  %399 = vmatprep.subr.mxu0 0.0
  %400 = vmatpush1.msra.mxu0 0.0
  %401 = vmatprep.subr.mxu0 0.0
  %402 = vmatpush1.msra.mxu0 0.0
  %403 = vmatprep.subr.mxu0 0.0
  %404 = vmatpush1.msra.mxu0 0.0
  %405 = vmatprep.subr.mxu0 0.0
  %406 = vmatpush1.msra.mxu0 0.0
  %407 = vmatprep.subr.mxu0 0.0
  %408 = vmatpush1.msra.mxu0 0.0
  %409 = vmatprep.subr.mxu0 0.0
  %410 = vmatpush1.msra.mxu0 0.0
  %411 = vmatprep.subr.mxu0 0.0
  %412 = vmatpush1.msra.mxu0 0.0
  %413 = vmatprep.subr.mxu0 0.0
  %414 = vmatpush1.msra.mxu0 0.0
  %415 = vmatprep.subr.mxu0 0.0
  %416 = vmatpush1.msra.mxu0 0.0
  %417 = vmatprep.subr.mxu0 0.0
  %418 = vmatpush1.msra.mxu0 0.0
  %419 = vmatprep.subr.mxu0 0.0
  %420 = vmatpush1.msra.mxu0 0.0
  %421 = vmatprep.subr.mxu0 0.0
  %422 = vmatpush1.msra.mxu0 0.0
  %423 = vmatprep.subr.mxu0 0.0
  %424 = vmatpush1.msra.mxu0 0.0
  %425 = vmatprep.subr.mxu0 0.0
  %426 = vmatpush1.msra.mxu0 0.0
  %427 = vmatprep.subr.mxu0 0.0
  %428 = vmatpush1.msra.mxu0 0.0
  %429 = vmatprep.subr.mxu0 0.0
  %430 = vmatpush1.msra.mxu0 0.0
  %431 = vmatprep.subr.mxu0 0.0
  %432 = vmatpush1.msra.mxu0 0.0
  %433 = vmatprep.subr.mxu0 0.0
  %434 = vmatpush1.msra.mxu0 0.0
  %435 = vmatprep.subr.mxu0 0.0
  %436 = vmatpush1.msra.mxu0 0.0
  %437 = vmatprep.subr.mxu0 0.0
  %438 = vmatpush1.msra.mxu0 0.0
  %439 = vmatprep.mubr.f32.mxu0 0.0
  %v440 = vand.u32 %v47, 4294901760
  %v441 = vsub.f32 %v47, %v440
  %v442 = vand.u32 %v441, 4294901760
  %443 = vmatmul.mubr.f32.gmra.mrb[0].mxu0 %v442
  %v444 = vpop.f32.mrb[0].mxu0
  %v445 = vadd.f32 %v360, %v444
  %v446 = vpop.f32.mrb[0].mxu0
  %447 = vdwg.mxu0
  %448 = vmatprep.subr.mxu0 0.0
  %v449 = vand.u32 %v27, 4294901760
  %v450 = vsub.f32 %v27, %v449
  %v451 = vand.u32 %v450, 4294901760
  %452 = vmatpush1.msra.mxu0 %v451
  %453 = vmatprep.subr.mxu0 0.0
  %v454 = vand.u32 %v28, 4294901760
  %v455 = vsub.f32 %v28, %v454
  %v456 = vand.u32 %v455, 4294901760
  %457 = vmatpush1.msra.mxu0 %v456
  %458 = vmatprep.subr.mxu0 0.0
  %v459 = vand.u32 %v29, 4294901760
  %v460 = vsub.f32 %v29, %v459
  %v461 = vand.u32 %v460, 4294901760
  %462 = vmatpush1.msra.mxu0 %v461
  %463 = vmatprep.subr.mxu0 0.0
  %v464 = vand.u32 %v30, 4294901760
  %v465 = vsub.f32 %v30, %v464
  %v466 = vand.u32 %v465, 4294901760
  %467 = vmatpush1.msra.mxu0 %v466
  %468 = vmatprep.subr.mxu0 0.0
  %v469 = vand.u32 %v31, 4294901760
  %v470 = vsub.f32 %v31, %v469
  %v471 = vand.u32 %v470, 4294901760
  %472 = vmatpush1.msra.mxu0 %v471
  %473 = vmatprep.subr.mxu0 0.0
  %v474 = vand.u32 %v32, 4294901760
  %v475 = vsub.f32 %v32, %v474
  %v476 = vand.u32 %v475, 4294901760
  %477 = vmatpush1.msra.mxu0 %v476
  %478 = vmatprep.subr.mxu0 0.0
  %v479 = vand.u32 %v33, 4294901760
  %v480 = vsub.f32 %v33, %v479
  %v481 = vand.u32 %v480, 4294901760
  %482 = vmatpush1.msra.mxu0 %v481
  %483 = vmatprep.subr.mxu0 0.0
  %v484 = vand.u32 %v34, 4294901760
  %v485 = vsub.f32 %v34, %v484
  %v486 = vand.u32 %v485, 4294901760
  %487 = vmatpush1.msra.mxu0 %v486
  %488 = vmatprep.subr.mxu0 0.0
  %v489 = vand.u32 %v35, 4294901760
  %v490 = vsub.f32 %v35, %v489
  %v491 = vand.u32 %v490, 4294901760
  %492 = vmatpush1.msra.mxu0 %v491
  %493 = vmatprep.subr.mxu0 0.0
  %v494 = vand.u32 %v36, 4294901760
  %v495 = vsub.f32 %v36, %v494
  %v496 = vand.u32 %v495, 4294901760
  %497 = vmatpush1.msra.mxu0 %v496
  %498 = vmatprep.subr.mxu0 0.0
  %v499 = vand.u32 %v37, 4294901760
  %v500 = vsub.f32 %v37, %v499
  %v501 = vand.u32 %v500, 4294901760
  %502 = vmatpush1.msra.mxu0 %v501
  %503 = vmatprep.subr.mxu0 0.0
  %v504 = vand.u32 %v38, 4294901760
  %v505 = vsub.f32 %v38, %v504
  %v506 = vand.u32 %v505, 4294901760
  %507 = vmatpush1.msra.mxu0 %v506
  %508 = vmatprep.subr.mxu0 0.0
  %509 = vmatpush1.msra.mxu0 0.0
  %510 = vmatprep.subr.mxu0 0.0
  %511 = vmatpush1.msra.mxu0 0.0
  %512 = vmatprep.subr.mxu0 0.0
  %513 = vmatpush1.msra.mxu0 0.0
  %514 = vmatprep.subr.mxu0 0.0
  %515 = vmatpush1.msra.mxu0 0.0
  %516 = vmatprep.subr.mxu0 0.0
  %517 = vmatpush1.msra.mxu0 0.0
  %518 = vmatprep.subr.mxu0 0.0
  %519 = vmatpush1.msra.mxu0 0.0
  %520 = vmatprep.subr.mxu0 0.0
  %521 = vmatpush1.msra.mxu0 0.0
  %522 = vmatprep.subr.mxu0 0.0
  %523 = vmatpush1.msra.mxu0 0.0
  %524 = vmatprep.subr.mxu0 0.0
  %525 = vmatpush1.msra.mxu0 0.0
  %526 = vmatprep.subr.mxu0 0.0
  %527 = vmatpush1.msra.mxu0 0.0
  %528 = vmatprep.subr.mxu0 0.0
  %529 = vmatpush1.msra.mxu0 0.0
  %530 = vmatprep.subr.mxu0 0.0
  %531 = vmatpush1.msra.mxu0 0.0
  %532 = vmatprep.subr.mxu0 0.0
  %533 = vmatpush1.msra.mxu0 0.0
  %534 = vmatprep.subr.mxu0 0.0
  %535 = vmatpush1.msra.mxu0 0.0
  %536 = vmatprep.subr.mxu0 0.0
  %537 = vmatpush1.msra.mxu0 0.0
  %538 = vmatprep.subr.mxu0 0.0
  %539 = vmatpush1.msra.mxu0 0.0
  %540 = vmatprep.subr.mxu0 0.0
  %541 = vmatpush1.msra.mxu0 0.0
  %542 = vmatprep.subr.mxu0 0.0
  %543 = vmatpush1.msra.mxu0 0.0
  %544 = vmatprep.subr.mxu0 0.0
  %545 = vmatpush1.msra.mxu0 0.0
  %546 = vmatprep.subr.mxu0 0.0
  %547 = vmatpush1.msra.mxu0 0.0
  %548 = vmatprep.mubr.f32.mxu0 0.0
  %v549 = vand.u32 %v47, 4294901760
  %550 = vmatmul.mubr.f32.gmra.mrb[0].mxu0 %v549
  %v551 = vpop.f32.mrb[0].mxu0
  %v552 = vadd.f32 %v445, %v551
  %v553 = vpop.f32.mrb[0].mxu0
  %554 = vdwg.mxu0
  %555 = vmatprep.subr.mxu0 0.0
  %v556 = vand.u32 %v27, 4294901760
  %557 = vmatpush1.msra.mxu0 %v556
  %558 = vmatprep.subr.mxu0 0.0
  %v559 = vand.u32 %v28, 4294901760
  %560 = vmatpush1.msra.mxu0 %v559
  %561 = vmatprep.subr.mxu0 0.0
  %v562 = vand.u32 %v29, 4294901760
  %563 = vmatpush1.msra.mxu0 %v562
  %564 = vmatprep.subr.mxu0 0.0
  %v565 = vand.u32 %v30, 4294901760
  %566 = vmatpush1.msra.mxu0 %v565
  %567 = vmatprep.subr.mxu0 0.0
  %v568 = vand.u32 %v31, 4294901760
  %569 = vmatpush1.msra.mxu0 %v568
  %570 = vmatprep.subr.mxu0 0.0
  %v571 = vand.u32 %v32, 4294901760
  %572 = vmatpush1.msra.mxu0 %v571
  %573 = vmatprep.subr.mxu0 0.0
  %v574 = vand.u32 %v33, 4294901760
  %575 = vmatpush1.msra.mxu0 %v574
  %576 = vmatprep.subr.mxu0 0.0
  %v577 = vand.u32 %v34, 4294901760
  %578 = vmatpush1.msra.mxu0 %v577
  %579 = vmatprep.subr.mxu0 0.0
  %v580 = vand.u32 %v35, 4294901760
  %581 = vmatpush1.msra.mxu0 %v580
  %582 = vmatprep.subr.mxu0 0.0
  %v583 = vand.u32 %v36, 4294901760
  %584 = vmatpush1.msra.mxu0 %v583
  %585 = vmatprep.subr.mxu0 0.0
  %v586 = vand.u32 %v37, 4294901760
  %587 = vmatpush1.msra.mxu0 %v586
  %588 = vmatprep.subr.mxu0 0.0
  %v589 = vand.u32 %v38, 4294901760
  %590 = vmatpush1.msra.mxu0 %v589
  %591 = vmatprep.subr.mxu0 0.0
  %592 = vmatpush1.msra.mxu0 0.0
  %593 = vmatprep.subr.mxu0 0.0
  %594 = vmatpush1.msra.mxu0 0.0
  %595 = vmatprep.subr.mxu0 0.0
  %596 = vmatpush1.msra.mxu0 0.0
  %597 = vmatprep.subr.mxu0 0.0
  %598 = vmatpush1.msra.mxu0 0.0
  %599 = vmatprep.subr.mxu0 0.0
  %600 = vmatpush1.msra.mxu0 0.0
  %601 = vmatprep.subr.mxu0 0.0
  %602 = vmatpush1.msra.mxu0 0.0
  %603 = vmatprep.subr.mxu0 0.0
  %604 = vmatpush1.msra.mxu0 0.0
  %605 = vmatprep.subr.mxu0 0.0
  %606 = vmatpush1.msra.mxu0 0.0
  %607 = vmatprep.subr.mxu0 0.0
  %608 = vmatpush1.msra.mxu0 0.0
  %609 = vmatprep.subr.mxu0 0.0
  %610 = vmatpush1.msra.mxu0 0.0
  %611 = vmatprep.subr.mxu0 0.0
  %612 = vmatpush1.msra.mxu0 0.0
  %613 = vmatprep.subr.mxu0 0.0
  %614 = vmatpush1.msra.mxu0 0.0
  %615 = vmatprep.subr.mxu0 0.0
  %616 = vmatpush1.msra.mxu0 0.0
  %617 = vmatprep.subr.mxu0 0.0
  %618 = vmatpush1.msra.mxu0 0.0
  %619 = vmatprep.subr.mxu0 0.0
  %620 = vmatpush1.msra.mxu0 0.0
  %621 = vmatprep.subr.mxu0 0.0
  %622 = vmatpush1.msra.mxu0 0.0
  %623 = vmatprep.subr.mxu0 0.0
  %624 = vmatpush1.msra.mxu0 0.0
  %625 = vmatprep.subr.mxu0 0.0
  %626 = vmatpush1.msra.mxu0 0.0
  %627 = vmatprep.subr.mxu0 0.0
  %628 = vmatpush1.msra.mxu0 0.0
  %629 = vmatprep.subr.mxu0 0.0
  %630 = vmatpush1.msra.mxu0 0.0
  %631 = vmatprep.mubr.f32.mxu0 0.0
  %v632 = vand.u32 %v47, 4294901760
  %633 = vmatmul.mubr.f32.gmra.mrb[0].mxu0 %v632
  %v634 = vpop.f32.mrb[0].mxu0
  %v635 = vadd.f32 %v552, %v634
  %v636 = vpop.f32.mrb[0].mxu0
  %637 = vdwg.mxu0
  %vm638 = vcmp.ge.f32.partialorder %v635, 0.0
  %v639 = vmul.f32 %v635, 0.01
  %v640 = vsel %vm638, %v635, %v639
  %v641 = vld [vmem:[%s3] sm:$0xff]
  %v642 = vld [vmem:[%s3 + $0x8] sm:$0xff]
  %v643 = vld [vmem:[%s3 + $0x10] sm:$0xff]
  %v644 = vld [vmem:[%s3 + $0x18] sm:$0xff]
  %v645 = vld [vmem:[%s3 + $0x20] sm:$0xff]
  %v646 = vld [vmem:[%s3 + $0x28] sm:$0xff]
  %v647 = vld [vmem:[%s3 + $0x30] sm:$0xff]
  %v648 = vld [vmem:[%s3 + $0x38] sm:$0xff]
  %v649 = vld [vmem:[%s3 + $0x40] sm:$0xff]
  %v650 = vld [vmem:[%s3 + $0x48] sm:$0xff]
  %v651 = vld [vmem:[%s3 + $0x50] sm:$0xff]
  %v652 = vld [vmem:[%s3 + $0x58] sm:$0xff]
  %v653 = vld [vmem:[%s3 + $0x60] sm:$0xff]
  %v654 = vld [vmem:[%s3 + $0x68] sm:$0xff]
  %v655 = vld [vmem:[%s3 + $0x70] sm:$0xff]
  %v656 = vld [vmem:[%s3 + $0x78] sm:$0xff]
  %v658 = vlaneseq
  %v659 = vshrl.u32 %v658, 7
  %v660 = vsub.s32 0, %v659
  %v661 = vrot.slane %v24, %v660
  %663 = vmatprep.subr.mxu0 0.0
  %v664 = vand.u32 %v641, 4294901760
  %665 = vmatpush1.msra.mxu0 %v664
  %666 = vmatprep.subr.mxu0 0.0
  %v667 = vand.u32 %v642, 4294901760
  %668 = vmatpush1.msra.mxu0 %v667
  %669 = vmatprep.subr.mxu0 0.0
  %v670 = vand.u32 %v643, 4294901760
  %671 = vmatpush1.msra.mxu0 %v670
  %672 = vmatprep.subr.mxu0 0.0
  %v673 = vand.u32 %v644, 4294901760
  %674 = vmatpush1.msra.mxu0 %v673
  %675 = vmatprep.subr.mxu0 0.0
  %v676 = vand.u32 %v645, 4294901760
  %677 = vmatpush1.msra.mxu0 %v676
  %678 = vmatprep.subr.mxu0 0.0
  %v679 = vand.u32 %v646, 4294901760
  %680 = vmatpush1.msra.mxu0 %v679
  %681 = vmatprep.subr.mxu0 0.0
  %v682 = vand.u32 %v647, 4294901760
  %683 = vmatpush1.msra.mxu0 %v682
  %684 = vmatprep.subr.mxu0 0.0
  %v685 = vand.u32 %v648, 4294901760
  %686 = vmatpush1.msra.mxu0 %v685
  %687 = vmatprep.subr.mxu0 0.0
  %v688 = vand.u32 %v649, 4294901760
  %689 = vmatpush1.msra.mxu0 %v688
  %690 = vmatprep.subr.mxu0 0.0
  %v691 = vand.u32 %v650, 4294901760
  %692 = vmatpush1.msra.mxu0 %v691
  %693 = vmatprep.subr.mxu0 0.0
  %v694 = vand.u32 %v651, 4294901760
  %695 = vmatpush1.msra.mxu0 %v694
  %696 = vmatprep.subr.mxu0 0.0
  %v697 = vand.u32 %v652, 4294901760
  %698 = vmatpush1.msra.mxu0 %v697
  %699 = vmatprep.subr.mxu0 0.0
  %v700 = vand.u32 %v653, 4294901760
  %701 = vmatpush1.msra.mxu0 %v700
  %702 = vmatprep.subr.mxu0 0.0
  %v703 = vand.u32 %v654, 4294901760
  %704 = vmatpush1.msra.mxu0 %v703
  %705 = vmatprep.subr.mxu0 0.0
  %v706 = vand.u32 %v655, 4294901760
  %707 = vmatpush1.msra.mxu0 %v706
  %708 = vmatprep.subr.mxu0 0.0
  %v709 = vand.u32 %v656, 4294901760
  %710 = vmatpush1.msra.mxu0 %v709
  %711 = vmatprep.subr.mxu0 0.0
  %712 = vmatpush1.msra.mxu0 0.0
  %713 = vmatprep.subr.mxu0 0.0
  %714 = vmatpush1.msra.mxu0 0.0
  %715 = vmatprep.subr.mxu0 0.0
  %716 = vmatpush1.msra.mxu0 0.0
  %717 = vmatprep.subr.mxu0 0.0
  %718 = vmatpush1.msra.mxu0 0.0
  %719 = vmatprep.subr.mxu0 0.0
  %720 = vmatpush1.msra.mxu0 0.0
  %721 = vmatprep.subr.mxu0 0.0
  %722 = vmatpush1.msra.mxu0 0.0
  %723 = vmatprep.subr.mxu0 0.0
  %724 = vmatpush1.msra.mxu0 0.0
  %725 = vmatprep.subr.mxu0 0.0
  %726 = vmatpush1.msra.mxu0 0.0
  %727 = vmatprep.subr.mxu0 0.0
  %728 = vmatpush1.msra.mxu0 0.0
  %729 = vmatprep.subr.mxu0 0.0
  %730 = vmatpush1.msra.mxu0 0.0
  %731 = vmatprep.subr.mxu0 0.0
  %732 = vmatpush1.msra.mxu0 0.0
  %733 = vmatprep.subr.mxu0 0.0
  %734 = vmatpush1.msra.mxu0 0.0
  %735 = vmatprep.subr.mxu0 0.0
  %736 = vmatpush1.msra.mxu0 0.0
  %737 = vmatprep.subr.mxu0 0.0
  %738 = vmatpush1.msra.mxu0 0.0
  %739 = vmatprep.subr.mxu0 0.0
  %740 = vmatpush1.msra.mxu0 0.0
  %741 = vmatprep.subr.mxu0 0.0
  %742 = vmatpush1.msra.mxu0 0.0
  %743 = vmatprep.mubr.f32.mxu0 0.0
  %v744 = vand.u32 %v640, 4294901760
  %v745 = vsub.f32 %v640, %v744
  %v746 = vand.u32 %v745, 4294901760
  %v747 = vsub.f32 %v745, %v746
  %v748 = vand.u32 %v747, 4294901760
  %749 = vmatmul.mubr.f32.gmra.mrb[0].mxu0 %v748
  %v750 = vpop.f32.mrb[0].mxu0
  %v751 = vadd.f32 %v661, %v750
  %v752 = vpop.f32.mrb[0].mxu0
  %753 = vdwg.mxu0
  %754 = vmatprep.subr.mxu0 0.0
  %v755 = vand.u32 %v641, 4294901760
  %v756 = vsub.f32 %v641, %v755
  %v757 = vand.u32 %v756, 4294901760
  %v758 = vsub.f32 %v756, %v757
  %v759 = vand.u32 %v758, 4294901760
  %760 = vmatpush1.msra.mxu0 %v759
  %761 = vmatprep.subr.mxu0 0.0
  %v762 = vand.u32 %v642, 4294901760
  %v763 = vsub.f32 %v642, %v762
  %v764 = vand.u32 %v763, 4294901760
  %v765 = vsub.f32 %v763, %v764
  %v766 = vand.u32 %v765, 4294901760
  %767 = vmatpush1.msra.mxu0 %v766
  %768 = vmatprep.subr.mxu0 0.0
  %v769 = vand.u32 %v643, 4294901760
  %v770 = vsub.f32 %v643, %v769
  %v771 = vand.u32 %v770, 4294901760
  %v772 = vsub.f32 %v770, %v771
  %v773 = vand.u32 %v772, 4294901760
  %774 = vmatpush1.msra.mxu0 %v773
  %775 = vmatprep.subr.mxu0 0.0
  %v776 = vand.u32 %v644, 4294901760
  %v777 = vsub.f32 %v644, %v776
  %v778 = vand.u32 %v777, 4294901760
  %v779 = vsub.f32 %v777, %v778
  %v780 = vand.u32 %v779, 4294901760
  %781 = vmatpush1.msra.mxu0 %v780
  %782 = vmatprep.subr.mxu0 0.0
  %v783 = vand.u32 %v645, 4294901760
  %v784 = vsub.f32 %v645, %v783
  %v785 = vand.u32 %v784, 4294901760
  %v786 = vsub.f32 %v784, %v785
  %v787 = vand.u32 %v786, 4294901760
  %788 = vmatpush1.msra.mxu0 %v787
  %789 = vmatprep.subr.mxu0 0.0
  %v790 = vand.u32 %v646, 4294901760
  %v791 = vsub.f32 %v646, %v790
  %v792 = vand.u32 %v791, 4294901760
  %v793 = vsub.f32 %v791, %v792
  %v794 = vand.u32 %v793, 4294901760
  %795 = vmatpush1.msra.mxu0 %v794
  %796 = vmatprep.subr.mxu0 0.0
  %v797 = vand.u32 %v647, 4294901760
  %v798 = vsub.f32 %v647, %v797
  %v799 = vand.u32 %v798, 4294901760
  %v800 = vsub.f32 %v798, %v799
  %v801 = vand.u32 %v800, 4294901760
  %802 = vmatpush1.msra.mxu0 %v801
  %803 = vmatprep.subr.mxu0 0.0
  %v804 = vand.u32 %v648, 4294901760
  %v805 = vsub.f32 %v648, %v804
  %v806 = vand.u32 %v805, 4294901760
  %v807 = vsub.f32 %v805, %v806
  %v808 = vand.u32 %v807, 4294901760
  %809 = vmatpush1.msra.mxu0 %v808
  %810 = vmatprep.subr.mxu0 0.0
  %v811 = vand.u32 %v649, 4294901760
  %v812 = vsub.f32 %v649, %v811
  %v813 = vand.u32 %v812, 4294901760
  %v814 = vsub.f32 %v812, %v813
  %v815 = vand.u32 %v814, 4294901760
  %816 = vmatpush1.msra.mxu0 %v815
  %817 = vmatprep.subr.mxu0 0.0
  %v818 = vand.u32 %v650, 4294901760
  %v819 = vsub.f32 %v650, %v818
  %v820 = vand.u32 %v819, 4294901760
  %v821 = vsub.f32 %v819, %v820
  %v822 = vand.u32 %v821, 4294901760
  %823 = vmatpush1.msra.mxu0 %v822
  %824 = vmatprep.subr.mxu0 0.0
  %v825 = vand.u32 %v651, 4294901760
  %v826 = vsub.f32 %v651, %v825
  %v827 = vand.u32 %v826, 4294901760
  %v828 = vsub.f32 %v826, %v827
  %v829 = vand.u32 %v828, 4294901760
  %830 = vmatpush1.msra.mxu0 %v829
  %831 = vmatprep.subr.mxu0 0.0
  %v832 = vand.u32 %v652, 4294901760
  %v833 = vsub.f32 %v652, %v832
  %v834 = vand.u32 %v833, 4294901760
  %v835 = vsub.f32 %v833, %v834
  %v836 = vand.u32 %v835, 4294901760
  %837 = vmatpush1.msra.mxu0 %v836
  %838 = vmatprep.subr.mxu0 0.0
  %v839 = vand.u32 %v653, 4294901760
  %v840 = vsub.f32 %v653, %v839
  %v841 = vand.u32 %v840, 4294901760
  %v842 = vsub.f32 %v840, %v841
  %v843 = vand.u32 %v842, 4294901760
  %844 = vmatpush1.msra.mxu0 %v843
  %845 = vmatprep.subr.mxu0 0.0
  %v846 = vand.u32 %v654, 4294901760
  %v847 = vsub.f32 %v654, %v846
  %v848 = vand.u32 %v847, 4294901760
  %v849 = vsub.f32 %v847, %v848
  %v850 = vand.u32 %v849, 4294901760
  %851 = vmatpush1.msra.mxu0 %v850
  %852 = vmatprep.subr.mxu0 0.0
  %v853 = vand.u32 %v655, 4294901760
  %v854 = vsub.f32 %v655, %v853
  %v855 = vand.u32 %v854, 4294901760
  %v856 = vsub.f32 %v854, %v855
  %v857 = vand.u32 %v856, 4294901760
  %858 = vmatpush1.msra.mxu0 %v857
  %859 = vmatprep.subr.mxu0 0.0
  %v860 = vand.u32 %v656, 4294901760
  %v861 = vsub.f32 %v656, %v860
  %v862 = vand.u32 %v861, 4294901760
  %v863 = vsub.f32 %v861, %v862
  %v864 = vand.u32 %v863, 4294901760
  %865 = vmatpush1.msra.mxu0 %v864
  %866 = vmatprep.subr.mxu0 0.0
  %867 = vmatpush1.msra.mxu0 0.0
  %868 = vmatprep.subr.mxu0 0.0
  %869 = vmatpush1.msra.mxu0 0.0
  %870 = vmatprep.subr.mxu0 0.0
  %871 = vmatpush1.msra.mxu0 0.0
  %872 = vmatprep.subr.mxu0 0.0
  %873 = vmatpush1.msra.mxu0 0.0
  %874 = vmatprep.subr.mxu0 0.0
  %875 = vmatpush1.msra.mxu0 0.0
  %876 = vmatprep.subr.mxu0 0.0
  %877 = vmatpush1.msra.mxu0 0.0
  %878 = vmatprep.subr.mxu0 0.0
  %879 = vmatpush1.msra.mxu0 0.0
  %880 = vmatprep.subr.mxu0 0.0
  %881 = vmatpush1.msra.mxu0 0.0
  %882 = vmatprep.subr.mxu0 0.0
  %883 = vmatpush1.msra.mxu0 0.0
  %884 = vmatprep.subr.mxu0 0.0
  %885 = vmatpush1.msra.mxu0 0.0
  %886 = vmatprep.subr.mxu0 0.0
  %887 = vmatpush1.msra.mxu0 0.0
  %888 = vmatprep.subr.mxu0 0.0
  %889 = vmatpush1.msra.mxu0 0.0
  %890 = vmatprep.subr.mxu0 0.0
  %891 = vmatpush1.msra.mxu0 0.0
  %892 = vmatprep.subr.mxu0 0.0
  %893 = vmatpush1.msra.mxu0 0.0
  %894 = vmatprep.subr.mxu0 0.0
  %895 = vmatpush1.msra.mxu0 0.0
  %896 = vmatprep.subr.mxu0 0.0
  %897 = vmatpush1.msra.mxu0 0.0
  %898 = vmatprep.mubr.f32.mxu0 0.0
  %v899 = vand.u32 %v640, 4294901760
  %900 = vmatmul.mubr.f32.gmra.mrb[0].mxu0 %v899
  %v901 = vpop.f32.mrb[0].mxu0
  %v902 = vadd.f32 %v751, %v901
  %v903 = vpop.f32.mrb[0].mxu0
  %904 = vdwg.mxu0
  %905 = vmatprep.subr.mxu0 0.0
  %v906 = vand.u32 %v641, 4294901760
  %v907 = vsub.f32 %v641, %v906
  %908 = vmatpush1.msra.mxu0 %v907
  %909 = vmatprep.subr.mxu0 0.0
  %v910 = vand.u32 %v642, 4294901760
  %v911 = vsub.f32 %v642, %v910
  %912 = vmatpush1.msra.mxu0 %v911
  %913 = vmatprep.subr.mxu0 0.0
  %v914 = vand.u32 %v643, 4294901760
  %v915 = vsub.f32 %v643, %v914
  %916 = vmatpush1.msra.mxu0 %v915
  %917 = vmatprep.subr.mxu0 0.0
  %v918 = vand.u32 %v644, 4294901760
  %v919 = vsub.f32 %v644, %v918
  %920 = vmatpush1.msra.mxu0 %v919
  %921 = vmatprep.subr.mxu0 0.0
  %v922 = vand.u32 %v645, 4294901760
  %v923 = vsub.f32 %v645, %v922
  %924 = vmatpush1.msra.mxu0 %v923
  %925 = vmatprep.subr.mxu0 0.0
  %v926 = vand.u32 %v646, 4294901760
  %v927 = vsub.f32 %v646, %v926
  %928 = vmatpush1.msra.mxu0 %v927
  %929 = vmatprep.subr.mxu0 0.0
  %v930 = vand.u32 %v647, 4294901760
  %v931 = vsub.f32 %v647, %v930
  %932 = vmatpush1.msra.mxu0 %v931
  %933 = vmatprep.subr.mxu0 0.0
  %v934 = vand.u32 %v648, 4294901760
  %v935 = vsub.f32 %v648, %v934
  %936 = vmatpush1.msra.mxu0 %v935
  %937 = vmatprep.subr.mxu0 0.0
  %v938 = vand.u32 %v649, 4294901760
  %v939 = vsub.f32 %v649, %v938
  %940 = vmatpush1.msra.mxu0 %v939
  %941 = vmatprep.subr.mxu0 0.0
  %v942 = vand.u32 %v650, 4294901760
  %v943 = vsub.f32 %v650, %v942
  %944 = vmatpush1.msra.mxu0 %v943
  %945 = vmatprep.subr.mxu0 0.0
  %v946 = vand.u32 %v651, 4294901760
  %v947 = vsub.f32 %v651, %v946
  %948 = vmatpush1.msra.mxu0 %v947
  %949 = vmatprep.subr.mxu0 0.0
  %v950 = vand.u32 %v652, 4294901760
  %v951 = vsub.f32 %v652, %v950
  %952 = vmatpush1.msra.mxu0 %v951
  %953 = vmatprep.subr.mxu0 0.0
  %v954 = vand.u32 %v653, 4294901760
  %v955 = vsub.f32 %v653, %v954
  %956 = vmatpush1.msra.mxu0 %v955
  %957 = vmatprep.subr.mxu0 0.0
  %v958 = vand.u32 %v654, 4294901760
  %v959 = vsub.f32 %v654, %v958
  %960 = vmatpush1.msra.mxu0 %v959
  %961 = vmatprep.subr.mxu0 0.0
  %v962 = vand.u32 %v655, 4294901760
  %v963 = vsub.f32 %v655, %v962
  %964 = vmatpush1.msra.mxu0 %v963
  %965 = vmatprep.subr.mxu0 0.0
  %v966 = vand.u32 %v656, 4294901760
  %v967 = vsub.f32 %v656, %v966
  %968 = vmatpush1.msra.mxu0 %v967
  %969 = vmatprep.subr.mxu0 0.0
  %970 = vmatpush1.msra.mxu0 0.0
  %971 = vmatprep.subr.mxu0 0.0
  %972 = vmatpush1.msra.mxu0 0.0
  %973 = vmatprep.subr.mxu0 0.0
  %974 = vmatpush1.msra.mxu0 0.0
  %975 = vmatprep.subr.mxu0 0.0
  %976 = vmatpush1.msra.mxu0 0.0
  %977 = vmatprep.subr.mxu0 0.0
  %978 = vmatpush1.msra.mxu0 0.0
  %979 = vmatprep.subr.mxu0 0.0
  %980 = vmatpush1.msra.mxu0 0.0
  %981 = vmatprep.subr.mxu0 0.0
  %982 = vmatpush1.msra.mxu0 0.0
  %983 = vmatprep.subr.mxu0 0.0
  %984 = vmatpush1.msra.mxu0 0.0
  %985 = vmatprep.subr.mxu0 0.0
  %986 = vmatpush1.msra.mxu0 0.0
  %987 = vmatprep.subr.mxu0 0.0
  %988 = vmatpush1.msra.mxu0 0.0
  %989 = vmatprep.subr.mxu0 0.0
  %990 = vmatpush1.msra.mxu0 0.0
  %991 = vmatprep.subr.mxu0 0.0
  %992 = vmatpush1.msra.mxu0 0.0
  %993 = vmatprep.subr.mxu0 0.0
  %994 = vmatpush1.msra.mxu0 0.0
  %995 = vmatprep.subr.mxu0 0.0
  %996 = vmatpush1.msra.mxu0 0.0
  %997 = vmatprep.subr.mxu0 0.0
  %998 = vmatpush1.msra.mxu0 0.0
  %999 = vmatprep.subr.mxu0 0.0
  %1000 = vmatpush1.msra.mxu0 0.0
  %1001 = vmatprep.mubr.f32.mxu0 0.0
  %v1002 = vand.u32 %v640, 4294901760
  %v1003 = vsub.f32 %v640, %v1002
  %1004 = vmatmul.mubr.f32.gmra.mrb[0].mxu0 %v1003
  %v1005 = vpop.f32.mrb[0].mxu0
  %v1006 = vadd.f32 %v902, %v1005
  %v1007 = vpop.f32.mrb[0].mxu0
  %1008 = vdwg.mxu0
  %1009 = vmatprep.subr.mxu0 0.0
  %v1010 = vand.u32 %v641, 4294901760
  %1011 = vmatpush1.msra.mxu0 %v1010
  %1012 = vmatprep.subr.mxu0 0.0
  %v1013 = vand.u32 %v642, 4294901760
  %1014 = vmatpush1.msra.mxu0 %v1013
  %1015 = vmatprep.subr.mxu0 0.0
  %v1016 = vand.u32 %v643, 4294901760
  %1017 = vmatpush1.msra.mxu0 %v1016
  %1018 = vmatprep.subr.mxu0 0.0
  %v1019 = vand.u32 %v644, 4294901760
  %1020 = vmatpush1.msra.mxu0 %v1019
  %1021 = vmatprep.subr.mxu0 0.0
  %v1022 = vand.u32 %v645, 4294901760
  %1023 = vmatpush1.msra.mxu0 %v1022
  %1024 = vmatprep.subr.mxu0 0.0
  %v1025 = vand.u32 %v646, 4294901760
  %1026 = vmatpush1.msra.mxu0 %v1025
  %1027 = vmatprep.subr.mxu0 0.0
  %v1028 = vand.u32 %v647, 4294901760
  %1029 = vmatpush1.msra.mxu0 %v1028
  %1030 = vmatprep.subr.mxu0 0.0
  %v1031 = vand.u32 %v648, 4294901760
  %1032 = vmatpush1.msra.mxu0 %v1031
  %1033 = vmatprep.subr.mxu0 0.0
  %v1034 = vand.u32 %v649, 4294901760
  %1035 = vmatpush1.msra.mxu0 %v1034
  %1036 = vmatprep.subr.mxu0 0.0
  %v1037 = vand.u32 %v650, 4294901760
  %1038 = vmatpush1.msra.mxu0 %v1037
  %1039 = vmatprep.subr.mxu0 0.0
  %v1040 = vand.u32 %v651, 4294901760
  %1041 = vmatpush1.msra.mxu0 %v1040
  %1042 = vmatprep.subr.mxu0 0.0
  %v1043 = vand.u32 %v652, 4294901760
  %1044 = vmatpush1.msra.mxu0 %v1043
  %1045 = vmatprep.subr.mxu0 0.0
  %v1046 = vand.u32 %v653, 4294901760
  %1047 = vmatpush1.msra.mxu0 %v1046
  %1048 = vmatprep.subr.mxu0 0.0
  %v1049 = vand.u32 %v654, 4294901760
  %1050 = vmatpush1.msra.mxu0 %v1049
  %1051 = vmatprep.subr.mxu0 0.0
  %v1052 = vand.u32 %v655, 4294901760
  %1053 = vmatpush1.msra.mxu0 %v1052
  %1054 = vmatprep.subr.mxu0 0.0
  %v1055 = vand.u32 %v656, 4294901760
  %1056 = vmatpush1.msra.mxu0 %v1055
  %1057 = vmatprep.subr.mxu0 0.0
  %1058 = vmatpush1.msra.mxu0 0.0
  %1059 = vmatprep.subr.mxu0 0.0
  %1060 = vmatpush1.msra.mxu0 0.0
  %1061 = vmatprep.subr.mxu0 0.0
  %1062 = vmatpush1.msra.mxu0 0.0
  %1063 = vmatprep.subr.mxu0 0.0
  %1064 = vmatpush1.msra.mxu0 0.0
  %1065 = vmatprep.subr.mxu0 0.0
  %1066 = vmatpush1.msra.mxu0 0.0
  %1067 = vmatprep.subr.mxu0 0.0
  %1068 = vmatpush1.msra.mxu0 0.0
  %1069 = vmatprep.subr.mxu0 0.0
  %1070 = vmatpush1.msra.mxu0 0.0
  %1071 = vmatprep.subr.mxu0 0.0
  %1072 = vmatpush1.msra.mxu0 0.0
  %1073 = vmatprep.subr.mxu0 0.0
  %1074 = vmatpush1.msra.mxu0 0.0
  %1075 = vmatprep.subr.mxu0 0.0
  %1076 = vmatpush1.msra.mxu0 0.0
  %1077 = vmatprep.subr.mxu0 0.0
  %1078 = vmatpush1.msra.mxu0 0.0
  %1079 = vmatprep.subr.mxu0 0.0
  %1080 = vmatpush1.msra.mxu0 0.0
  %1081 = vmatprep.subr.mxu0 0.0
  %1082 = vmatpush1.msra.mxu0 0.0
  %1083 = vmatprep.subr.mxu0 0.0
  %1084 = vmatpush1.msra.mxu0 0.0
  %1085 = vmatprep.subr.mxu0 0.0
  %1086 = vmatpush1.msra.mxu0 0.0
  %1087 = vmatprep.subr.mxu0 0.0
  %1088 = vmatpush1.msra.mxu0 0.0
  %1089 = vmatprep.mubr.f32.mxu0 0.0
  %v1090 = vand.u32 %v640, 4294901760
  %v1091 = vsub.f32 %v640, %v1090
  %v1092 = vand.u32 %v1091, 4294901760
  %1093 = vmatmul.mubr.f32.gmra.mrb[0].mxu0 %v1092
  %v1094 = vpop.f32.mrb[0].mxu0
  %v1095 = vadd.f32 %v1006, %v1094
  %v1096 = vpop.f32.mrb[0].mxu0
  %1097 = vdwg.mxu0
  %1098 = vmatprep.subr.mxu0 0.0
  %v1099 = vand.u32 %v641, 4294901760
  %v1100 = vsub.f32 %v641, %v1099
  %v1101 = vand.u32 %v1100, 4294901760
  %1102 = vmatpush1.msra.mxu0 %v1101
  %1103 = vmatprep.subr.mxu0 0.0
  %v1104 = vand.u32 %v642, 4294901760
  %v1105 = vsub.f32 %v642, %v1104
  %v1106 = vand.u32 %v1105, 4294901760
  %1107 = vmatpush1.msra.mxu0 %v1106
  %1108 = vmatprep.subr.mxu0 0.0
  %v1109 = vand.u32 %v643, 4294901760
  %v1110 = vsub.f32 %v643, %v1109
  %v1111 = vand.u32 %v1110, 4294901760
  %1112 = vmatpush1.msra.mxu0 %v1111
  %1113 = vmatprep.subr.mxu0 0.0
  %v1114 = vand.u32 %v644, 4294901760
  %v1115 = vsub.f32 %v644, %v1114
  %v1116 = vand.u32 %v1115, 4294901760
  %1117 = vmatpush1.msra.mxu0 %v1116
  %1118 = vmatprep.subr.mxu0 0.0
  %v1119 = vand.u32 %v645, 4294901760
  %v1120 = vsub.f32 %v645, %v1119
  %v1121 = vand.u32 %v1120, 4294901760
  %1122 = vmatpush1.msra.mxu0 %v1121
  %1123 = vmatprep.subr.mxu0 0.0
  %v1124 = vand.u32 %v646, 4294901760
  %v1125 = vsub.f32 %v646, %v1124
  %v1126 = vand.u32 %v1125, 4294901760
  %1127 = vmatpush1.msra.mxu0 %v1126
  %1128 = vmatprep.subr.mxu0 0.0
  %v1129 = vand.u32 %v647, 4294901760
  %v1130 = vsub.f32 %v647, %v1129
  %v1131 = vand.u32 %v1130, 4294901760
  %1132 = vmatpush1.msra.mxu0 %v1131
  %1133 = vmatprep.subr.mxu0 0.0
  %v1134 = vand.u32 %v648, 4294901760
  %v1135 = vsub.f32 %v648, %v1134
  %v1136 = vand.u32 %v1135, 4294901760
  %1137 = vmatpush1.msra.mxu0 %v1136
  %1138 = vmatprep.subr.mxu0 0.0
  %v1139 = vand.u32 %v649, 4294901760
  %v1140 = vsub.f32 %v649, %v1139
  %v1141 = vand.u32 %v1140, 4294901760
  %1142 = vmatpush1.msra.mxu0 %v1141
  %1143 = vmatprep.subr.mxu0 0.0
  %v1144 = vand.u32 %v650, 4294901760
  %v1145 = vsub.f32 %v650, %v1144
  %v1146 = vand.u32 %v1145, 4294901760
  %1147 = vmatpush1.msra.mxu0 %v1146
  %1148 = vmatprep.subr.mxu0 0.0
  %v1149 = vand.u32 %v651, 4294901760
  %v1150 = vsub.f32 %v651, %v1149
  %v1151 = vand.u32 %v1150, 4294901760
  %1152 = vmatpush1.msra.mxu0 %v1151
  %1153 = vmatprep.subr.mxu0 0.0
  %v1154 = vand.u32 %v652, 4294901760
  %v1155 = vsub.f32 %v652, %v1154
  %v1156 = vand.u32 %v1155, 4294901760
  %1157 = vmatpush1.msra.mxu0 %v1156
  %1158 = vmatprep.subr.mxu0 0.0
  %v1159 = vand.u32 %v653, 4294901760
  %v1160 = vsub.f32 %v653, %v1159
  %v1161 = vand.u32 %v1160, 4294901760
  %1162 = vmatpush1.msra.mxu0 %v1161
  %1163 = vmatprep.subr.mxu0 0.0
  %v1164 = vand.u32 %v654, 4294901760
  %v1165 = vsub.f32 %v654, %v1164
  %v1166 = vand.u32 %v1165, 4294901760
  %1167 = vmatpush1.msra.mxu0 %v1166
  %1168 = vmatprep.subr.mxu0 0.0
  %v1169 = vand.u32 %v655, 4294901760
  %v1170 = vsub.f32 %v655, %v1169
  %v1171 = vand.u32 %v1170, 4294901760
  %1172 = vmatpush1.msra.mxu0 %v1171
  %1173 = vmatprep.subr.mxu0 0.0
  %v1174 = vand.u32 %v656, 4294901760
  %v1175 = vsub.f32 %v656, %v1174
  %v1176 = vand.u32 %v1175, 4294901760
  %1177 = vmatpush1.msra.mxu0 %v1176
  %1178 = vmatprep.subr.mxu0 0.0
  %1179 = vmatpush1.msra.mxu0 0.0
  %1180 = vmatprep.subr.mxu0 0.0
  %1181 = vmatpush1.msra.mxu0 0.0
  %1182 = vmatprep.subr.mxu0 0.0
  %1183 = vmatpush1.msra.mxu0 0.0
  %1184 = vmatprep.subr.mxu0 0.0
  %1185 = vmatpush1.msra.mxu0 0.0
  %1186 = vmatprep.subr.mxu0 0.0
  %1187 = vmatpush1.msra.mxu0 0.0
  %1188 = vmatprep.subr.mxu0 0.0
  %1189 = vmatpush1.msra.mxu0 0.0
  %1190 = vmatprep.subr.mxu0 0.0
  %1191 = vmatpush1.msra.mxu0 0.0
  %1192 = vmatprep.subr.mxu0 0.0
  %1193 = vmatpush1.msra.mxu0 0.0
  %1194 = vmatprep.subr.mxu0 0.0
  %1195 = vmatpush1.msra.mxu0 0.0
  %1196 = vmatprep.subr.mxu0 0.0
  %1197 = vmatpush1.msra.mxu0 0.0
  %1198 = vmatprep.subr.mxu0 0.0
  %1199 = vmatpush1.msra.mxu0 0.0
  %1200 = vmatprep.subr.mxu0 0.0
  %1201 = vmatpush1.msra.mxu0 0.0
  %1202 = vmatprep.subr.mxu0 0.0
  %1203 = vmatpush1.msra.mxu0 0.0
  %1204 = vmatprep.subr.mxu0 0.0
  %1205 = vmatpush1.msra.mxu0 0.0
  %1206 = vmatprep.subr.mxu0 0.0
  %1207 = vmatpush1.msra.mxu0 0.0
  %1208 = vmatprep.subr.mxu0 0.0
  %1209 = vmatpush1.msra.mxu0 0.0
  %1210 = vmatprep.mubr.f32.mxu0 0.0
  %v1211 = vand.u32 %v640, 4294901760
  %1212 = vmatmul.mubr.f32.gmra.mrb[0].mxu0 %v1211
  %v1213 = vpop.f32.mrb[0].mxu0
  %v1214 = vadd.f32 %v1095, %v1213
  %v1215 = vpop.f32.mrb[0].mxu0
  %1216 = vdwg.mxu0
  %1217 = vmatprep.subr.mxu0 0.0
  %v1218 = vand.u32 %v641, 4294901760
  %1219 = vmatpush1.msra.mxu0 %v1218
  %1220 = vmatprep.subr.mxu0 0.0
  %v1221 = vand.u32 %v642, 4294901760
  %1222 = vmatpush1.msra.mxu0 %v1221
  %1223 = vmatprep.subr.mxu0 0.0
  %v1224 = vand.u32 %v643, 4294901760
  %1225 = vmatpush1.msra.mxu0 %v1224
  %1226 = vmatprep.subr.mxu0 0.0
  %v1227 = vand.u32 %v644, 4294901760
  %1228 = vmatpush1.msra.mxu0 %v1227
  %1229 = vmatprep.subr.mxu0 0.0
  %v1230 = vand.u32 %v645, 4294901760
  %1231 = vmatpush1.msra.mxu0 %v1230
  %1232 = vmatprep.subr.mxu0 0.0
  %v1233 = vand.u32 %v646, 4294901760
  %1234 = vmatpush1.msra.mxu0 %v1233
  %1235 = vmatprep.subr.mxu0 0.0
  %v1236 = vand.u32 %v647, 4294901760
  %1237 = vmatpush1.msra.mxu0 %v1236
  %1238 = vmatprep.subr.mxu0 0.0
  %v1239 = vand.u32 %v648, 4294901760
  %1240 = vmatpush1.msra.mxu0 %v1239
  %1241 = vmatprep.subr.mxu0 0.0
  %v1242 = vand.u32 %v649, 4294901760
  %1243 = vmatpush1.msra.mxu0 %v1242
  %1244 = vmatprep.subr.mxu0 0.0
  %v1245 = vand.u32 %v650, 4294901760
  %1246 = vmatpush1.msra.mxu0 %v1245
  %1247 = vmatprep.subr.mxu0 0.0
  %v1248 = vand.u32 %v651, 4294901760
  %1249 = vmatpush1.msra.mxu0 %v1248
  %1250 = vmatprep.subr.mxu0 0.0
  %v1251 = vand.u32 %v652, 4294901760
  %1252 = vmatpush1.msra.mxu0 %v1251
  %1253 = vmatprep.subr.mxu0 0.0
  %v1254 = vand.u32 %v653, 4294901760
  %1255 = vmatpush1.msra.mxu0 %v1254
  %1256 = vmatprep.subr.mxu0 0.0
  %v1257 = vand.u32 %v654, 4294901760
  %1258 = vmatpush1.msra.mxu0 %v1257
  %1259 = vmatprep.subr.mxu0 0.0
  %v1260 = vand.u32 %v655, 4294901760
  %1261 = vmatpush1.msra.mxu0 %v1260
  %1262 = vmatprep.subr.mxu0 0.0
  %v1263 = vand.u32 %v656, 4294901760
  %1264 = vmatpush1.msra.mxu0 %v1263
  %1265 = vmatprep.subr.mxu0 0.0
  %1266 = vmatpush1.msra.mxu0 0.0
  %1267 = vmatprep.subr.mxu0 0.0
  %1268 = vmatpush1.msra.mxu0 0.0
  %1269 = vmatprep.subr.mxu0 0.0
  %1270 = vmatpush1.msra.mxu0 0.0
  %1271 = vmatprep.subr.mxu0 0.0
  %1272 = vmatpush1.msra.mxu0 0.0
  %1273 = vmatprep.subr.mxu0 0.0
  %1274 = vmatpush1.msra.mxu0 0.0
  %1275 = vmatprep.subr.mxu0 0.0
  %1276 = vmatpush1.msra.mxu0 0.0
  %1277 = vmatprep.subr.mxu0 0.0
  %1278 = vmatpush1.msra.mxu0 0.0
  %1279 = vmatprep.subr.mxu0 0.0
  %1280 = vmatpush1.msra.mxu0 0.0
  %1281 = vmatprep.subr.mxu0 0.0
  %1282 = vmatpush1.msra.mxu0 0.0
  %1283 = vmatprep.subr.mxu0 0.0
  %1284 = vmatpush1.msra.mxu0 0.0
  %1285 = vmatprep.subr.mxu0 0.0
  %1286 = vmatpush1.msra.mxu0 0.0
  %1287 = vmatprep.subr.mxu0 0.0
  %1288 = vmatpush1.msra.mxu0 0.0
  %1289 = vmatprep.subr.mxu0 0.0
  %1290 = vmatpush1.msra.mxu0 0.0
  %1291 = vmatprep.subr.mxu0 0.0
  %1292 = vmatpush1.msra.mxu0 0.0
  %1293 = vmatprep.subr.mxu0 0.0
  %1294 = vmatpush1.msra.mxu0 0.0
  %1295 = vmatprep.subr.mxu0 0.0
  %1296 = vmatpush1.msra.mxu0 0.0
  %1297 = vmatprep.mubr.f32.mxu0 0.0
  %v1298 = vand.u32 %v640, 4294901760
  %1299 = vmatmul.mubr.f32.gmra.mrb[0].mxu0 %v1298
  %v1300 = vpop.f32.mrb[0].mxu0
  %v1301 = vadd.f32 %v1214, %v1300
  %v1302 = vpop.f32.mrb[0].mxu0
  %1303 = vdwg.mxu0
  %vm1304 = vcmp.ge.f32.partialorder %v1301, 0.0
  %v1306 = vlaneseq
  %v1307 = vshrl.u32 %v1306, 7
  %v1308 = vsub.s32 0, %v1307
  %v1309 = vrot.slane %v25, %v1308
  %v1311 = vmul.f32 %v1309, %v1301
  %v1312 = vsel %vm1304, %v1301, %v1311
  %1313 = vst [vmem:[%s6] sm:$0xff] %v1312
  // Predicated region
  $region26: #{_lambda_.1} parent=0 // pred_check
    _
  $region27: #{_lambda_.1} parent=0 // pred_check_branch
    %1315 = sbr.rel (0) target = $region29
  $region28: #{_lambda_.1} parent=0 // pred_region
    _
  $region29: #{_lambda_.1} parent=0 // pred_fallthru
    _
  // Predicated region
  $region30: #{_lambda_.1} parent=0 // pred_check
    _
  $region31: #{_lambda_.1} parent=0 // pred_check_branch
    %1317 = sbr.rel (0) target = $region33
  $region32: #{_lambda_.1} parent=0 // pred_region
    _
  $region33: #{_lambda_.1} parent=0 // pred_fallthru
    _

</llo_original>
